<compile_context>
chip_gen: v7x
topology: tpu7x:2x2x1
jax: 0.10.0
libtpu: 0.0.40
codegen_flags: <defaults>
</compile_context>

<pallas_src>
import functools

import numpy as np
import jax
import jax.numpy as jnp
from jax.experimental import pallas as pl
from jax.experimental.pallas import tpu as pltpu


def _round_up(v, m):
    return ((v + m - 1) // m) * m


# ----------------------------------------------------------------------------
# Fused kernel.  Grid = (phase, row_tile):
#   phase 0: ARMA layer 1 (per-stack ReLU, stack mean)        -> h row tiles
#   phase 1: ARMA layer 2 (identity act, K-mean pre-folded)   -> log_softmax
# The full hidden activation h lives in a VMEM scratch between the phases, so
# only the O(N^2) adjacency is streamed from HBM (once per phase, row tiles
# double-buffered by the BlockSpec pipeline).
# ----------------------------------------------------------------------------
def _fused_net_kernel(a_ref, x_ref, wi1_ref, wr1_ref, b1_ref,
                      wi2_ref, wr2_ref, b2_ref,
                      logp_ref, h_ref,
                      t1_s, h_s, t2_s,
                      *, k_stacks: int, hid: int, tm: int):
    p = pl.program_id(0)                       # phase
    i = pl.program_id(1)                       # row-tile index
    row0 = pl.multiple_of(i * tm, 8)
    a = a_ref[...]                             # (tm, Np) bf16 row tile of A_hat

    # ---------------- phase 0 : conv1 ---------------------------------------
    @pl.when(p == 0)
    def _phase0():
        @pl.when(i == 0)
        def _():
            # Init projection for ALL rows, computed once and kept in VMEM.
            t1_s[...] = jnp.dot(
                x_ref[...], wi1_ref[...],
                preferred_element_type=jnp.float32).astype(t1_s.dtype)

        x_rows = x_ref[pl.ds(row0, tm), :]                       # (tm, F_in)
        r1 = jnp.dot(x_rows, wr1_ref[...],
                     preferred_element_type=jnp.float32)         # root term
        prop = jnp.dot(a, t1_s[...],
                       preferred_element_type=jnp.float32)       # propagation
        s = jnp.maximum(prop + r1 + b1_ref[...], 0.0)            # per-stack ReLU
        # Stack mean over the K lane groups (K*hid = 32 sits inside one vreg
        # lane tile; these sub-128-lane slices are small relayouts).
        h = s[:, :hid]
        for k in range(1, k_stacks):
            h = h + s[:, k * hid:(k + 1) * hid]
        h = h * (1.0 / k_stacks)          # outer F.relu is a no-op (h >= 0)

        h_s[pl.ds(row0, tm), :] = h       # keep full h for phase 1
        h_ref[...] = h.astype(h_ref.dtype)
        logp_ref[...] = jnp.zeros_like(logp_ref)   # placeholder; phase 1 rewrites

    # ---------------- phase 1 : conv2 + log_softmax -------------------------
    @pl.when(p == 1)
    def _phase1():
        @pl.when(i == 0)
        def _():
            # Layer-2 init projection for ALL rows (h is complete after phase 0).
            t2_s[...] = jnp.dot(
                h_s[...].astype(jnp.bfloat16), wi2_ref[...],
                preferred_element_type=jnp.float32).astype(t2_s.dtype)

        h_rows = h_s[pl.ds(row0, tm), :]
        r2 = jnp.dot(h_rows.astype(jnp.bfloat16), wr2_ref[...],
                     preferred_element_type=jnp.float32)
        z = jnp.dot(a, t2_s[...], preferred_element_type=jnp.float32)
        z = z + r2 + b2_ref[...]

        # log_softmax epilogue (exp/log land on the otherwise idle EUP).
        z = z - jnp.max(z, axis=-1, keepdims=True)
        lse = jnp.log(jnp.sum(jnp.exp(z), axis=-1, keepdims=True))
        logp_ref[...] = (z - lse).astype(logp_ref.dtype)
        # This output block is flushed once per phase -> restore correct rows.
        h_ref[...] = h_rows.astype(h_ref.dtype)


def net_forward(x, a_hat, params, *, max_rows_per_tile=None):
    N, F_in = x.shape
    K, _, HID = params["w_init1"].shape
    _, _, C = params["w_init2"].shape

    # ---- host-side weight prep ---------------------------------------------
    # Layer 1: K stacks concatenated along the lane axis (stack-major); init
    # and root projections kept as SEPARATE operands (lane-aligned, no mid-vreg
    # t/r slicing inside the kernel).
    wi1 = jnp.transpose(params["w_init1"], (1, 0, 2)).reshape(F_in, K * HID)
    wr1 = jnp.transpose(params["w_root1"], (1, 0, 2)).reshape(F_in, K * HID)
    b1 = params["bias1"].reshape(1, K * HID).astype(jnp.float32)
    # Layer 2: activation is identity, so the K-stack mean folds into weights.
    wi2 = jnp.mean(params["w_init2"], axis=0)
    wr2 = jnp.mean(params["w_root2"], axis=0)
    b2 = jnp.mean(params["bias2"], axis=0).reshape(1, C).astype(jnp.float32)

    # bf16 MXU operands; accumulation stays f32 inside the kernel.
    wi1, wr1 = wi1.astype(jnp.bfloat16), wr1.astype(jnp.bfloat16)
    wi2, wr2 = wi2.astype(jnp.bfloat16), wr2.astype(jnp.bfloat16)
    xb = x.astype(jnp.bfloat16)
    a = a_hat if a_hat.dtype == jnp.bfloat16 else a_hat.astype(jnp.bfloat16)

    # ---- row tile size from the physical VMEM budget ------------------------
    try:
        info = pltpu.get_tpu_info()
        vmem_cap = int(getattr(info, "vmem_capacity_bytes", 64 << 20))
    except Exception:  # interpret mode / older jax: assume the smallest part
        vmem_cap = 64 << 20
    vmem_limit = int(min(vmem_cap - (8 << 20), 112 << 20))

    fixed = (N * F_in * 2                       # X (bf16, resident)
             + N * K * HID * 2                  # t1 scratch (bf16)
             + N * HID * 4                      # h scratch (f32)
             + N * C * 2                        # t2 scratch (bf16)
             + (F_in + HID) * (K * HID + C) * 2 * 2 + (1 << 16))
    per_row = 2 * (N * 2) + 2 * (HID + C) * 4   # dbl-buffered A tile + out tiles
    budget = max(vmem_limit - fixed - (4 << 20), 1 << 20)
    tm = max(8, min(_round_up(N, 8), (budget // per_row) // 8 * 8))
    if max_rows_per_tile is not None:
        tm = max(8, min(tm, _round_up(max_rows_per_tile, 8)))
    Np = _round_up(N, tm)
    n_tiles = Np // tm

    pad = Np - N
    if pad:
        a = jnp.pad(a, ((0, pad), (0, pad)))
        xb = jnp.pad(xb, ((0, pad), (0, 0)))

    kernel = functools.partial(_fused_net_kernel, k_stacks=K, hid=HID, tm=tm)

    cost = pl.CostEstimate(
        flops=int(4 * Np * Np * (K * HID + C)       # two propagation passes
                  + 4 * Np * F_in * K * HID         # layer-1 projections
                  + 4 * Np * HID * C),              # layer-2 projections
        transcendentals=int(Np * (C + 1)),
        bytes_accessed=int(2 * Np * Np * 2 + Np * (F_in * 2 + (HID + C) * 4)))

    grid_spec = pltpu.PrefetchScalarGridSpec(
        num_scalar_prefetch=0,
        grid=(2, n_tiles),
        in_specs=[
            pl.BlockSpec((tm, Np), lambda p, i: (i, 0)),         # A_hat row tiles
            pl.BlockSpec((Np, F_in), lambda p, i: (0, 0)),       # X (resident)
            pl.BlockSpec((F_in, K * HID), lambda p, i: (0, 0)),  # Wi1 (all stacks)
            pl.BlockSpec((F_in, K * HID), lambda p, i: (0, 0)),  # Wr1 (all stacks)
            pl.BlockSpec((1, K * HID), lambda p, i: (0, 0)),     # b1
            pl.BlockSpec((HID, C), lambda p, i: (0, 0)),         # Wi2 (K-mean)
            pl.BlockSpec((HID, C), lambda p, i: (0, 0)),         # Wr2 (K-mean)
            pl.BlockSpec((1, C), lambda p, i: (0, 0)),           # b2 (K-mean)
        ],
        out_specs=(
            pl.BlockSpec((tm, C), lambda p, i: (i, 0)),          # log-probs
            pl.BlockSpec((tm, HID), lambda p, i: (i, 0)),        # agg_feature (h)
        ),
        scratch_shapes=[
            pltpu.VMEM((Np, K * HID), jnp.bfloat16),             # t1 = X @ Wi1
            pltpu.VMEM((Np, HID), jnp.float32),                  # full hidden h
            pltpu.VMEM((Np, C), jnp.bfloat16),                   # t2 = h @ Wi2
        ],
    )

    logp, h = pl.pallas_call(
        kernel,
        out_shape=(jax.ShapeDtypeStruct((Np, C), jnp.float32),
                   jax.ShapeDtypeStruct((Np, HID), jnp.float32)),
        grid_spec=grid_spec,
        compiler_params=pltpu.CompilerParams(
            dimension_semantics=("arbitrary", "arbitrary"),
            vmem_limit_bytes=vmem_limit),
        cost_estimate=cost,
    )(a, xb, wi1, wr1, b1, wi2, wr2, b2)
    return logp[:N], h[:N]


# ----------------------------------------------------------------------------
# Glue: GCN normalization (gcn_norm, add_self_loops=False) to a dense A_hat,
# with A_hat[i, j] = weight of edge (src=j -> dst=i) so propagation = A_hat @ X.
# A_hat is emitted in bf16 once at build time (the kernel's MXU operand dtype).
# ----------------------------------------------------------------------------
def build_dense_gcn_adj(edge_index, num_nodes):
    src, dst = edge_index[0], edge_index[1]
    w = jnp.ones(src.shape[0], dtype=jnp.float32)
    deg = jnp.zeros((num_nodes,), jnp.float32).at[dst].add(w)
    dinv = jnp.where(deg > 0, deg ** -0.5, 0.0)
    norm = dinv[src] * w * dinv[dst]
    dense = jnp.zeros((num_nodes, num_nodes), jnp.float32).at[dst, src].add(norm)
    return dense.astype(jnp.bfloat16)


def net_reference(x, a_hat, params):
    """Pure-JAX f32 reference (inputs quantized to bf16 like the kernel sees)."""
    f32 = jnp.float32
    a = a_hat.astype(f32)
    xq = x.astype(jnp.bfloat16).astype(f32)
    q = lambda w: w.astype(jnp.bfloat16).astype(f32)

    def arma(h_in, wi, wr, b, relu_act):
        t = jnp.einsum('nf,kfo->kno', h_in, q(wi))
        r = jnp.einsum('nf,kfo->kno', h_in, q(wr))
        s = jnp.einsum('mn,kno->kmo', a, t) + r + b[:, None, :].astype(f32)
        if relu_act:
            s = jnp.maximum(s, 0.0)
        return jnp.mean(s, axis=0)

    h = jnp.maximum(
        arma(xq, params["w_init1"], params["w_root1"], params["bias1"], True), 0.0)
    z = arma(h, params["w_init2"], params["w_root2"], params["bias2"], False)
    return jax.nn.log_softmax(z, axis=1), h


def glorot(key, shape):
    fan_in, fan_out = shape[-2], shape[-1]
    limit = (6.0 / (fan_in + fan_out)) ** 0.5
    return jax.random.uniform(key, shape, jnp.float32, -limit, limit)


if __name__ == "__main__":
    # Small synthetic problem: N nodes, F_in features, 16 hidden, C classes, K=2.
    N, F_IN, HID, C, K = 64, 32, 16, 4, 2

    key = jax.random.PRNGKey(0)
    kx, k1, k2, k3, k4, kb1, kb2 = jax.random.split(key, 7)

    x = jax.random.normal(kx, (N, F_IN), jnp.float32)

    # Undirected ring graph: edges (i -> i+1) and (i+1 -> i).
    src = np.arange(N, dtype=np.int32)
    dst = (src + 1) % N
    edge_index = jnp.asarray(
        np.stack([np.concatenate([src, dst]), np.concatenate([dst, src])]), jnp.int32)

    a_hat = build_dense_gcn_adj(edge_index, N)   # bf16, built once

    params = {
        # conv1: ARMAConv(F_IN, HID, num_stacks=2, num_layers=1, shared_weights=True)
        "w_init1": glorot(k1, (K, F_IN, HID)),
        "w_root1": glorot(k2, (K, F_IN, HID)),
        "bias1": 0.1 * jax.random.normal(kb1, (K, HID), jnp.float32),
        # conv2: ARMAConv(HID, C, num_stacks=2, num_layers=1, shared_weights=True, act=id)
        "w_init2": glorot(k3, (K, HID, C)),
        "w_root2": glorot(k4, (K, HID, C)),
        "bias2": 0.1 * jax.random.normal(kb2, (K, C), jnp.float32),
    }

    # max_rows_per_tile=16 forces a multi-tile grid (2 phases x 4 row tiles) so
    # the row-tiled / two-phase path is exercised even at this toy size.
    fwd = jax.jit(functools.partial(net_forward, max_rows_per_tile=16))
    logp, agg = fwd(x, a_hat, params)
    jax.block_until_ready((logp, agg))

    # Mirror the PyTorch return: (log_softmax tensor, agg_feature as numpy).
    agg_np = np.asarray(agg)
    assert logp.shape == (N, C) and agg_np.shape == (N, HID)
    # log_softmax rows must exponentiate-sum to 1.
    assert np.allclose(np.exp(np.asarray(logp)).sum(axis=1), 1.0, atol=1e-3)

    # Validate against a pure-JAX reference (bf16 operand quantization matched).
    logp_ref, h_ref = net_reference(x, a_hat, params)
    assert np.allclose(agg_np, np.asarray(h_ref), atol=5e-2, rtol=5e-2)
    assert np.allclose(np.asarray(logp), np.asarray(logp_ref), atol=7e-2, rtol=7e-2)

    print("KERNEL_OK")
</pallas_src>

<mosaic_0001>
module attributes {stable_mosaic.version = 11 : i64} {
  func.func @_fused_net_kernel(%arg0: i32, %arg1: i32, %arg2: memref<16x64xbf16, #tpu.memory_space<vmem>>, %arg3: memref<64x32xbf16, #tpu.memory_space<vmem>>, %arg4: memref<32x32xbf16, #tpu.memory_space<vmem>>, %arg5: memref<32x32xbf16, #tpu.memory_space<vmem>>, %arg6: memref<1x32xf32, #tpu.memory_space<vmem>>, %arg7: memref<16x4xbf16, #tpu.memory_space<vmem>>, %arg8: memref<16x4xbf16, #tpu.memory_space<vmem>>, %arg9: memref<1x4xf32, #tpu.memory_space<vmem>>, %arg10: memref<16x4xf32, #tpu.memory_space<vmem>>, %arg11: memref<16x16xf32, #tpu.memory_space<vmem>>, %arg12: memref<64x32xbf16, #tpu.memory_space<vmem>>, %arg13: memref<64x16xf32, #tpu.memory_space<vmem>>, %arg14: memref<64x4xbf16, #tpu.memory_space<vmem>>) attributes {dimension_semantics = [#tpu.dimension_semantics<arbitrary>, #tpu.dimension_semantics<arbitrary>], iteration_bounds = array<i64: 2, 4>, scalar_prefetch = 0 : i64, scratch_operands = 3 : i64, tpu.core_type = #tpu.core_type<tc>, window_params = [{transform_indices = @transform_0, window_bounds = array<i64: 16, 64>}, {pipeline_mode = #tpu.pipeline_mode<synchronous>, transform_indices = @transform_1, window_bounds = array<i64: 64, 32>}, {pipeline_mode = #tpu.pipeline_mode<synchronous>, transform_indices = @transform_2, window_bounds = array<i64: 32, 32>}, {pipeline_mode = #tpu.pipeline_mode<synchronous>, transform_indices = @transform_3, window_bounds = array<i64: 32, 32>}, {pipeline_mode = #tpu.pipeline_mode<synchronous>, transform_indices = @transform_4, window_bounds = array<i64: 1, 32>}, {pipeline_mode = #tpu.pipeline_mode<synchronous>, transform_indices = @transform_5, window_bounds = array<i64: 16, 4>}, {pipeline_mode = #tpu.pipeline_mode<synchronous>, transform_indices = @transform_6, window_bounds = array<i64: 16, 4>}, {pipeline_mode = #tpu.pipeline_mode<synchronous>, transform_indices = @transform_7, window_bounds = array<i64: 1, 4>}, {transform_indices = @transform_8, window_bounds = array<i64: 16, 4>}, {transform_indices = @transform_9, window_bounds = array<i64: 16, 16>}]} {
    %c16_i32 = arith.constant 16 : i32
    %0 = arith.muli %arg1, %c16_i32 : i32
    %1 = tpu.assume_multiple %0, 8 : i32
    %c0 = arith.constant 0 : index
    %c0_0 = arith.constant 0 : index
    %2 = vector.load %arg2[%c0, %c0_0] : memref<16x64xbf16, #tpu.memory_space<vmem>>, vector<16x64xbf16>
    %c0_i32 = arith.constant 0 : i32
    %3 = arith.cmpi eq, %arg0, %c0_i32 : i32
    %4 = arith.extui %3 : i1 to i32
    %c0_i32_1 = arith.constant 0 : i32
    %5 = arith.cmpi ne, %4, %c0_i32_1 : i32
    scf.if %5 {
      %c0_i32_3 = arith.constant 0 : i32
      %9 = arith.cmpi eq, %arg1, %c0_i32_3 : i32
      %10 = arith.extui %9 : i1 to i32
      %c0_i32_4 = arith.constant 0 : i32
      %11 = arith.cmpi ne, %10, %c0_i32_4 : i32
      scf.if %11 {
        %c0_21 = arith.constant 0 : index
        %c0_22 = arith.constant 0 : index
        %34 = vector.load %arg3[%c0_21, %c0_22] : memref<64x32xbf16, #tpu.memory_space<vmem>>, vector<64x32xbf16>
        %c0_23 = arith.constant 0 : index
        %c0_24 = arith.constant 0 : index
        %35 = vector.load %arg4[%c0_23, %c0_24] : memref<32x32xbf16, #tpu.memory_space<vmem>>, vector<32x32xbf16>
        %cst_25 = arith.constant dense<0.000000e+00> : vector<64x32xf32>
        %36 = tpu.matmul %34, %35, %cst_25 {dimension_numbers = #tpu.dot_dimension_numbers<[1], [0], [0], [1], [0, 0, 1, 1], [], []>} : vector<64x32xbf16>, vector<32x32xbf16>, vector<64x32xf32> -> vector<64x32xf32>
        %37 = arith.truncf %36 : vector<64x32xf32> to vector<64x32xbf16>
        %c0_26 = arith.constant 0 : index
        %c0_27 = arith.constant 0 : index
        %38 = vector.load %arg12[%c0_26, %c0_27] : memref<64x32xbf16, #tpu.memory_space<vmem>>, vector<64x32xbf16>
        tpu.vector_store %arg12[%c0_26, %c0_27], %37 {strides = array<i32>} : memref<64x32xbf16, #tpu.memory_space<vmem>>, vector<64x32xbf16>,
      } else {
      }
      %12 = arith.index_cast %1 : i32 to index
      %c0_5 = arith.constant 0 : index
      %13 = vector.load %arg3[%12, %c0_5] : memref<64x32xbf16, #tpu.memory_space<vmem>>, vector<16x32xbf16>
      %c0_6 = arith.constant 0 : index
      %c0_7 = arith.constant 0 : index
      %14 = vector.load %arg5[%c0_6, %c0_7] : memref<32x32xbf16, #tpu.memory_space<vmem>>, vector<32x32xbf16>
      %cst = arith.constant dense<0.000000e+00> : vector<16x32xf32>
      %15 = tpu.matmul %13, %14, %cst {dimension_numbers = #tpu.dot_dimension_numbers<[1], [0], [0], [1], [0, 0, 1, 1], [], []>} : vector<16x32xbf16>, vector<32x32xbf16>, vector<16x32xf32> -> vector<16x32xf32>
      %c0_8 = arith.constant 0 : index
      %c0_9 = arith.constant 0 : index
      %16 = vector.load %arg12[%c0_8, %c0_9] : memref<64x32xbf16, #tpu.memory_space<vmem>>, vector<64x32xbf16>
      %cst_10 = arith.constant dense<0.000000e+00> : vector<16x32xf32>
      %17 = tpu.matmul %2, %16, %cst_10 {dimension_numbers = #tpu.dot_dimension_numbers<[1], [0], [0], [1], [0, 0, 1, 1], [], []>} : vector<16x64xbf16>, vector<64x32xbf16>, vector<16x32xf32> -> vector<16x32xf32>
      %18 = arith.addf %17, %15 : vector<16x32xf32>
      %c0_11 = arith.constant 0 : index
      %c0_12 = arith.constant 0 : index
      %19 = vector.load %arg6[%c0_11, %c0_12] : memref<1x32xf32, #tpu.memory_space<vmem>>, vector<1x32xf32>
      %20 = vector.broadcast %19 : vector<1x32xf32> to vector<16x32xf32>
      %21 = arith.addf %18, %20 : vector<16x32xf32>
      %cst_13 = arith.constant 0.000000e+00 : f32
      %22 = vector.broadcast %cst_13 : f32 to vector<16x32xf32>
      %23 = arith.maximumf %21, %22 : vector<16x32xf32>
      %24 = vector.extract_strided_slice %23 {offsets = [0, 0], sizes = [16, 16], strides = [1, 1]} : vector<16x32xf32> to vector<16x16xf32>
      %25 = vector.extract_strided_slice %23 {offsets = [0, 16], sizes = [16, 16], strides = [1, 1]} : vector<16x32xf32> to vector<16x16xf32>
      %26 = arith.addf %24, %25 : vector<16x16xf32>
      %cst_14 = arith.constant 5.000000e-01 : f32
      %27 = vector.broadcast %cst_14 : f32 to vector<16x16xf32>
      %28 = arith.mulf %26, %27 : vector<16x16xf32>
      %29 = arith.index_cast %1 : i32 to index
      %c0_15 = arith.constant 0 : index
      %30 = vector.load %arg13[%29, %c0_15] : memref<64x16xf32, #tpu.memory_space<vmem>>, vector<16x16xf32>
      tpu.vector_store %arg13[%29, %c0_15], %28 {strides = array<i32>} : memref<64x16xf32, #tpu.memory_space<vmem>>, vector<16x16xf32>,
      %c0_16 = arith.constant 0 : index
      %c0_17 = arith.constant 0 : index
      %31 = vector.load %arg11[%c0_16, %c0_17] : memref<16x16xf32, #tpu.memory_space<vmem>>, vector<16x16xf32>
      tpu.vector_store %arg11[%c0_16, %c0_17], %28 {strides = array<i32>} : memref<16x16xf32, #tpu.memory_space<vmem>>, vector<16x16xf32>,
      %cst_18 = arith.constant 0.000000e+00 : f32
      %32 = vector.broadcast %cst_18 : f32 to vector<16x4xf32>
      %c0_19 = arith.constant 0 : index
      %c0_20 = arith.constant 0 : index
      %33 = vector.load %arg10[%c0_19, %c0_20] : memref<16x4xf32, #tpu.memory_space<vmem>>, vector<16x4xf32>
      tpu.vector_store %arg10[%c0_19, %c0_20], %32 {strides = array<i32>} : memref<16x4xf32, #tpu.memory_space<vmem>>, vector<16x4xf32>,
    } else {
    }
    %c1_i32 = arith.constant 1 : i32
    %6 = arith.cmpi eq, %arg0, %c1_i32 : i32
    %7 = arith.extui %6 : i1 to i32
    %c0_i32_2 = arith.constant 0 : i32
    %8 = arith.cmpi ne, %7, %c0_i32_2 : i32
    scf.if %8 {
      %c0_i32_3 = arith.constant 0 : i32
      %9 = arith.cmpi eq, %arg1, %c0_i32_3 : i32
      %10 = arith.extui %9 : i1 to i32
      %c0_i32_4 = arith.constant 0 : i32
      %11 = arith.cmpi ne, %10, %c0_i32_4 : i32
      scf.if %11 {
        %c0_19 = arith.constant 0 : index
        %c0_20 = arith.constant 0 : index
        %35 = vector.load %arg13[%c0_19, %c0_20] : memref<64x16xf32, #tpu.memory_space<vmem>>, vector<64x16xf32>
        %36 = arith.truncf %35 : vector<64x16xf32> to vector<64x16xbf16>
        %c0_21 = arith.constant 0 : index
        %c0_22 = arith.constant 0 : index
        %37 = vector.load %arg7[%c0_21, %c0_22] : memref<16x4xbf16, #tpu.memory_space<vmem>>, vector<16x4xbf16>
        %cst_23 = arith.constant dense<0.000000e+00> : vector<64x4xf32>
        %38 = tpu.matmul %36, %37, %cst_23 {dimension_numbers = #tpu.dot_dimension_numbers<[1], [0], [0], [1], [0, 0, 1, 1], [], []>} : vector<64x16xbf16>, vector<16x4xbf16>, vector<64x4xf32> -> vector<64x4xf32>
        %39 = arith.truncf %38 : vector<64x4xf32> to vector<64x4xbf16>
        %c0_24 = arith.constant 0 : index
        %c0_25 = arith.constant 0 : index
        %40 = vector.load %arg14[%c0_24, %c0_25] : memref<64x4xbf16, #tpu.memory_space<vmem>>, vector<64x4xbf16>
        tpu.vector_store %arg14[%c0_24, %c0_25], %39 {strides = array<i32>} : memref<64x4xbf16, #tpu.memory_space<vmem>>, vector<64x4xbf16>,
      } else {
      }
      %12 = arith.index_cast %1 : i32 to index
      %c0_5 = arith.constant 0 : index
      %13 = vector.load %arg13[%12, %c0_5] : memref<64x16xf32, #tpu.memory_space<vmem>>, vector<16x16xf32>
      %14 = arith.truncf %13 : vector<16x16xf32> to vector<16x16xbf16>
      %c0_6 = arith.constant 0 : index
      %c0_7 = arith.constant 0 : index
      %15 = vector.load %arg8[%c0_6, %c0_7] : memref<16x4xbf16, #tpu.memory_space<vmem>>, vector<16x4xbf16>
      %cst = arith.constant dense<0.000000e+00> : vector<16x4xf32>
      %16 = tpu.matmul %14, %15, %cst {dimension_numbers = #tpu.dot_dimension_numbers<[1], [0], [0], [1], [0, 0, 1, 1], [], []>} : vector<16x16xbf16>, vector<16x4xbf16>, vector<16x4xf32> -> vector<16x4xf32>
      %c0_8 = arith.constant 0 : index
      %c0_9 = arith.constant 0 : index
      %17 = vector.load %arg14[%c0_8, %c0_9] : memref<64x4xbf16, #tpu.memory_space<vmem>>, vector<64x4xbf16>
      %cst_10 = arith.constant dense<0.000000e+00> : vector<16x4xf32>
      %18 = tpu.matmul %2, %17, %cst_10 {dimension_numbers = #tpu.dot_dimension_numbers<[1], [0], [0], [1], [0, 0, 1, 1], [], []>} : vector<16x64xbf16>, vector<64x4xbf16>, vector<16x4xf32> -> vector<16x4xf32>
      %19 = arith.addf %18, %16 : vector<16x4xf32>
      %c0_11 = arith.constant 0 : index
      %c0_12 = arith.constant 0 : index
      %20 = vector.load %arg9[%c0_11, %c0_12] : memref<1x4xf32, #tpu.memory_space<vmem>>, vector<1x4xf32>
      %21 = vector.broadcast %20 : vector<1x4xf32> to vector<16x4xf32>
      %22 = arith.addf %19, %21 : vector<16x4xf32>
      %cst_13 = arith.constant dense<0xFF800000> : vector<16xf32>
      %23 = vector.multi_reduction <maximumf>, %22, %cst_13 [1] : vector<16x4xf32> to vector<16xf32>
      %24 = vector.shape_cast %23 : vector<16xf32> to vector<16x1xf32>
      %25 = vector.broadcast %24 : vector<16x1xf32> to vector<16x4xf32>
      %26 = arith.subf %22, %25 : vector<16x4xf32>
      %27 = math.exp %26 : vector<16x4xf32>
      %cst_14 = arith.constant dense<0.000000e+00> : vector<16xf32>
      %28 = vector.multi_reduction <add>, %27, %cst_14 [1] : vector<16x4xf32> to vector<16xf32>
      %29 = vector.shape_cast %28 : vector<16xf32> to vector<16x1xf32>
      %30 = math.log %29 : vector<16x1xf32>
      %31 = vector.broadcast %30 : vector<16x1xf32> to vector<16x4xf32>
      %32 = arith.subf %26, %31 : vector<16x4xf32>
      %c0_15 = arith.constant 0 : index
      %c0_16 = arith.constant 0 : index
      %33 = vector.load %arg10[%c0_15, %c0_16] : memref<16x4xf32, #tpu.memory_space<vmem>>, vector<16x4xf32>
      tpu.vector_store %arg10[%c0_15, %c0_16], %32 {strides = array<i32>} : memref<16x4xf32, #tpu.memory_space<vmem>>, vector<16x4xf32>,
      %c0_17 = arith.constant 0 : index
      %c0_18 = arith.constant 0 : index
      %34 = vector.load %arg11[%c0_17, %c0_18] : memref<16x16xf32, #tpu.memory_space<vmem>>, vector<16x16xf32>
      tpu.vector_store %arg11[%c0_17, %c0_18], %13 {strides = array<i32>} : memref<16x16xf32, #tpu.memory_space<vmem>>, vector<16x16xf32>,
    } else {
    }
    return
  }
  func.func @transform_0(%arg0: i32, %arg1: i32) -> (i32, i32) {
    %c0_i32 = arith.constant 0 : i32
    %c0_i32_0 = arith.constant 0 : i32
    return %arg1, %c0_i32 : i32, i32
  }
  func.func @transform_1(%arg0: i32, %arg1: i32) -> (i32, i32) {
    %c0_i32 = arith.constant 0 : i32
    %c0_i32_0 = arith.constant 0 : i32
    %c0_i32_1 = arith.constant 0 : i32
    return %c0_i32, %c0_i32_0 : i32, i32
  }
  func.func @transform_2(%arg0: i32, %arg1: i32) -> (i32, i32) {
    %c0_i32 = arith.constant 0 : i32
    %c0_i32_0 = arith.constant 0 : i32
    %c0_i32_1 = arith.constant 0 : i32
    return %c0_i32, %c0_i32_0 : i32, i32
  }
  func.func @transform_3(%arg0: i32, %arg1: i32) -> (i32, i32) {
    %c0_i32 = arith.constant 0 : i32
    %c0_i32_0 = arith.constant 0 : i32
    %c0_i32_1 = arith.constant 0 : i32
    return %c0_i32, %c0_i32_0 : i32, i32
  }
  func.func @transform_4(%arg0: i32, %arg1: i32) -> (i32, i32) {
    %c0_i32 = arith.constant 0 : i32
    %c0_i32_0 = arith.constant 0 : i32
    %c0_i32_1 = arith.constant 0 : i32
    return %c0_i32, %c0_i32_0 : i32, i32
  }
  func.func @transform_5(%arg0: i32, %arg1: i32) -> (i32, i32) {
    %c0_i32 = arith.constant 0 : i32
    %c0_i32_0 = arith.constant 0 : i32
    %c0_i32_1 = arith.constant 0 : i32
    return %c0_i32, %c0_i32_0 : i32, i32
  }
  func.func @transform_6(%arg0: i32, %arg1: i32) -> (i32, i32) {
    %c0_i32 = arith.constant 0 : i32
    %c0_i32_0 = arith.constant 0 : i32
    %c0_i32_1 = arith.constant 0 : i32
    return %c0_i32, %c0_i32_0 : i32, i32
  }
  func.func @transform_7(%arg0: i32, %arg1: i32) -> (i32, i32) {
    %c0_i32 = arith.constant 0 : i32
    %c0_i32_0 = arith.constant 0 : i32
    %c0_i32_1 = arith.constant 0 : i32
    return %c0_i32, %c0_i32_0 : i32, i32
  }
  func.func @transform_8(%arg0: i32, %arg1: i32) -> (i32, i32) {
    %c0_i32 = arith.constant 0 : i32
    %c0_i32_0 = arith.constant 0 : i32
    return %arg1, %c0_i32 : i32, i32
  }
  func.func @transform_9(%arg0: i32, %arg1: i32) -> (i32, i32) {
    %c0_i32 = arith.constant 0 : i32
    %c0_i32_0 = arith.constant 0 : i32
    return %arg1, %c0_i32 : i32, i32
  }
}

</mosaic_0001>

<llo_original>
// kernel: net_forward.1
$region0: #{net_forward.1}
  #allocation0 [shape = 'u32[]', space=smem, size = 0x4, offset = 0x4, fixed_abs, tag = 'smem constant byte address 0x4 - core index']
  #allocation1 [shape = 'u32[144,128]{1,0:T(1,128)}', space=vmem, size = 0x12000, scoped, tag = 'internal scratch']
  #allocation2 [shape = 'bf16[64,32]{1,0:T(16,128)(2,1)}', space=vmem, size = 0x4000, scoped, tag = 'scratch operand']
  #allocation3 [shape = 'f32[64,16]{1,0:T(8,128)}', space=vmem, size = 0x8000, scoped, tag = 'scratch operand']
  #allocation4 [shape = 'bf16[64,4]{1,0:T(16,128)(2,1)}', space=vmem, size = 0x4000, scoped, tag = 'scratch operand']
  %s0 = inlined_call_operand.vmem [shape: bf16[64,64], index: 0, kind: input, shape index: {}]
  %s1 = inlined_call_operand.vmem [shape: bf16[64,32], index: 1, kind: input, shape index: {}]
  %s2 = inlined_call_operand.vmem [shape: bf16[32,32], index: 2, kind: input, shape index: {}]
  %s3 = inlined_call_operand.vmem [shape: bf16[32,32], index: 3, kind: input, shape index: {}]
  %s4 = inlined_call_operand.vmem [shape: f32[1,32], index: 4, kind: input, shape index: {}]
  %s5 = inlined_call_operand.vmem [shape: bf16[16,4], index: 5, kind: input, shape index: {}]
  %s6 = inlined_call_operand.vmem [shape: bf16[16,4], index: 6, kind: input, shape index: {}]
  %s7 = inlined_call_operand.vmem [shape: f32[1,4], index: 7, kind: input, shape index: {}]
  %s8 = inlined_call_operand.vmem [shape: f32[64,4], index: 8, kind: output, shape index: {0}]
  %s9 = inlined_call_operand.vmem [shape: f32[64,16], index: 9, kind: output, shape index: {1}]
  %10 = xla_tuple %s8, %s9
  %s11 = sld [smem:[#allocation0]]
  $region89: #{net_forward.1} parent=0
    _
  %s13 = ssub.s32 1, %s11
  %s14 = scalar_select 0, %s13, %s11
  loop: start=0, step=1, limit=10
  $region2: #{net_forward.1} parent=0 // loop_pre_header
    _
  $region3: #{net_forward.1} parent=0 // loop_header
    %s16 = sphi 0, %s20
    %p17 = scmp.ge.s32.totalorder %s16, 10
    %s23 = sphi 0, %s35
    %s24 = sphi 0, %s31
    %s25 = sphi 0, %s23
    %s26 = sphi 0, %s24
    %s27 = sphi 0, %s25
    %s28 = sphi 0, %s26
    %s38 = sphi 0, %s40
    %s41 = sphi 0, %s38
    %s42 = sphi 0, %s41
    %s58 = sphi 0, %s42
    %s62 = sphi 0, %s62
    %s64 = sphi 0, %s62
    %s65 = sphi 0, %s64
    %s79 = sphi 0, %s65
    %s83 = sphi 0, %s83
    %s85 = sphi 0, %s83
    %s86 = sphi 0, %s85
    %s100 = sphi 0, %s86
    %s104 = sphi 0, %s104
    %s106 = sphi 0, %s104
    %s107 = sphi 0, %s106
    %s121 = sphi 0, %s107
    %s125 = sphi 0, %s125
    %s127 = sphi 0, %s125
    %s128 = sphi 0, %s127
    %s142 = sphi 0, %s128
    %s146 = sphi 0, %s146
    %s148 = sphi 0, %s146
    %s149 = sphi 0, %s148
    %s163 = sphi 0, %s149
    %s167 = sphi 0, %s167
    %s169 = sphi 0, %s167
    %s170 = sphi 0, %s169
    %s184 = sphi 0, %s170
    %s188 = sphi 0, %s188
    %s190 = sphi 0, %s188
    %s191 = sphi 0, %s190
    %s205 = sphi 0, %s191
    %s211 = sphi 0, %s213
    %s214 = sphi 0, %s211
    %s215 = sphi 0, %s214
    %s231 = sphi 0, %s215
    %s237 = sphi 0, %s239
    %s240 = sphi 0, %s237
    %s241 = sphi 0, %s240
    %s257 = sphi 0, %s241
  $region4: #{net_forward.1} parent=0 // loop_header_branch
    %19 = sbr.rel (%p17) target = $region8
  $region5: #{net_forward.1} parent=0 // loop_body
    %s21 = ssub.s32 %s16, 1
    %s22 = ssub.s32 %s16, 2
    %s29 = sadd.s32 1, %s24
    %p30 = scmp.ge.s32.totalorder %s29, 4
    %s31 = scalar_select %p30, 0, %s29
    %s32 = sadd.s32 1, %s23
    %s33 = scalar_select %p30, %s32, %s23
    %p34 = scmp.ge.s32.totalorder %s33, 2
    %s35 = scalar_select %p34, 0, %s33
    %s36 = ssub.s32 %s24, %s31
    %p37 = scmp.eq.s32.totalorder %s36, 0
    %s39 = sadd.s32 %s38, 1
    %s40 = scalar_select %p37, %s38, %s39
    %p43 = pneg %p37
    %p44 = scmp.eq.s32.totalorder %s16, 7
    %p45 = por %p43, %p44
    %p46 = scmp.ne.s32.totalorder %s38, %s41
    %p47 = scmp.eq.s32.totalorder %s16, 0
    %p48 = por %p46, %p47
    %p49 = scmp.ne.s32.totalorder %s38, %s41
    %p50 = scmp.eq.s32.totalorder %s21, 7
    %p51 = por %p49, %p50
    %p52 = scmp.ne.s32.totalorder %s41, %s42
    %p53 = scmp.eq.s32.totalorder %s21, 0
    %p54 = por %p52, %p53
    %p55 = scmp.ne.s32.totalorder %s41, %s42
    %p56 = scmp.eq.s32.totalorder %s22, 7
    %p57 = por %p55, %p56
    %p59 = scmp.ne.s32.totalorder %s42, %s58
    %p60 = scmp.eq.s32.totalorder %s22, 0
    %p61 = por %p59, %p60
    %s63 = sadd.s32 %s62, 1
    %p66 = scmp.eq.s32.totalorder %s16, 7
    %p67 = scmp.ne.s32.totalorder %s62, %s64
    %p68 = scmp.eq.s32.totalorder %s16, 0
    %p69 = por %p67, %p68
    %p70 = scmp.ne.s32.totalorder %s62, %s64
    %p71 = scmp.eq.s32.totalorder %s21, 7
    %p72 = por %p70, %p71
    %p73 = scmp.ne.s32.totalorder %s64, %s65
    %p74 = scmp.eq.s32.totalorder %s21, 0
    %p75 = por %p73, %p74
    %p76 = scmp.ne.s32.totalorder %s64, %s65
    %p77 = scmp.eq.s32.totalorder %s22, 7
    %p78 = por %p76, %p77
    %p80 = scmp.ne.s32.totalorder %s65, %s79
    %p81 = scmp.eq.s32.totalorder %s22, 0
    %p82 = por %p80, %p81
    %s84 = sadd.s32 %s83, 1
    %p87 = scmp.eq.s32.totalorder %s16, 7
    %p88 = scmp.ne.s32.totalorder %s83, %s85
    %p89 = scmp.eq.s32.totalorder %s16, 0
    %p90 = por %p88, %p89
    %p91 = scmp.ne.s32.totalorder %s83, %s85
    %p92 = scmp.eq.s32.totalorder %s21, 7
    %p93 = por %p91, %p92
    %p94 = scmp.ne.s32.totalorder %s85, %s86
    %p95 = scmp.eq.s32.totalorder %s21, 0
    %p96 = por %p94, %p95
    %p97 = scmp.ne.s32.totalorder %s85, %s86
    %p98 = scmp.eq.s32.totalorder %s22, 7
    %p99 = por %p97, %p98
    %p101 = scmp.ne.s32.totalorder %s86, %s100
    %p102 = scmp.eq.s32.totalorder %s22, 0
    %p103 = por %p101, %p102
    %s105 = sadd.s32 %s104, 1
    %p108 = scmp.eq.s32.totalorder %s16, 7
    %p109 = scmp.ne.s32.totalorder %s104, %s106
    %p110 = scmp.eq.s32.totalorder %s16, 0
    %p111 = por %p109, %p110
    %p112 = scmp.ne.s32.totalorder %s104, %s106
    %p113 = scmp.eq.s32.totalorder %s21, 7
    %p114 = por %p112, %p113
    %p115 = scmp.ne.s32.totalorder %s106, %s107
    %p116 = scmp.eq.s32.totalorder %s21, 0
    %p117 = por %p115, %p116
    %p118 = scmp.ne.s32.totalorder %s106, %s107
    %p119 = scmp.eq.s32.totalorder %s22, 7
    %p120 = por %p118, %p119
    %p122 = scmp.ne.s32.totalorder %s107, %s121
    %p123 = scmp.eq.s32.totalorder %s22, 0
    %p124 = por %p122, %p123
    %s126 = sadd.s32 %s125, 1
    %p129 = scmp.eq.s32.totalorder %s16, 7
    %p130 = scmp.ne.s32.totalorder %s125, %s127
    %p131 = scmp.eq.s32.totalorder %s16, 0
    %p132 = por %p130, %p131
    %p133 = scmp.ne.s32.totalorder %s125, %s127
    %p134 = scmp.eq.s32.totalorder %s21, 7
    %p135 = por %p133, %p134
    %p136 = scmp.ne.s32.totalorder %s127, %s128
    %p137 = scmp.eq.s32.totalorder %s21, 0
    %p138 = por %p136, %p137
    %p139 = scmp.ne.s32.totalorder %s127, %s128
    %p140 = scmp.eq.s32.totalorder %s22, 7
    %p141 = por %p139, %p140
    %p143 = scmp.ne.s32.totalorder %s128, %s142
    %p144 = scmp.eq.s32.totalorder %s22, 0
    %p145 = por %p143, %p144
    %s147 = sadd.s32 %s146, 1
    %p150 = scmp.eq.s32.totalorder %s16, 7
    %p151 = scmp.ne.s32.totalorder %s146, %s148
    %p152 = scmp.eq.s32.totalorder %s16, 0
    %p153 = por %p151, %p152
    %p154 = scmp.ne.s32.totalorder %s146, %s148
    %p155 = scmp.eq.s32.totalorder %s21, 7
    %p156 = por %p154, %p155
    %p157 = scmp.ne.s32.totalorder %s148, %s149
    %p158 = scmp.eq.s32.totalorder %s21, 0
    %p159 = por %p157, %p158
    %p160 = scmp.ne.s32.totalorder %s148, %s149
    %p161 = scmp.eq.s32.totalorder %s22, 7
    %p162 = por %p160, %p161
    %p164 = scmp.ne.s32.totalorder %s149, %s163
    %p165 = scmp.eq.s32.totalorder %s22, 0
    %p166 = por %p164, %p165
    %s168 = sadd.s32 %s167, 1
    %p171 = scmp.eq.s32.totalorder %s16, 7
    %p172 = scmp.ne.s32.totalorder %s167, %s169
    %p173 = scmp.eq.s32.totalorder %s16, 0
    %p174 = por %p172, %p173
    %p175 = scmp.ne.s32.totalorder %s167, %s169
    %p176 = scmp.eq.s32.totalorder %s21, 7
    %p177 = por %p175, %p176
    %p178 = scmp.ne.s32.totalorder %s169, %s170
    %p179 = scmp.eq.s32.totalorder %s21, 0
    %p180 = por %p178, %p179
    %p181 = scmp.ne.s32.totalorder %s169, %s170
    %p182 = scmp.eq.s32.totalorder %s22, 7
    %p183 = por %p181, %p182
    %p185 = scmp.ne.s32.totalorder %s170, %s184
    %p186 = scmp.eq.s32.totalorder %s22, 0
    %p187 = por %p185, %p186
    %s189 = sadd.s32 %s188, 1
    %p192 = scmp.eq.s32.totalorder %s16, 7
    %p193 = scmp.ne.s32.totalorder %s188, %s190
    %p194 = scmp.eq.s32.totalorder %s16, 0
    %p195 = por %p193, %p194
    %p196 = scmp.ne.s32.totalorder %s188, %s190
    %p197 = scmp.eq.s32.totalorder %s21, 7
    %p198 = por %p196, %p197
    %p199 = scmp.ne.s32.totalorder %s190, %s191
    %p200 = scmp.eq.s32.totalorder %s21, 0
    %p201 = por %p199, %p200
    %p202 = scmp.ne.s32.totalorder %s190, %s191
    %p203 = scmp.eq.s32.totalorder %s22, 7
    %p204 = por %p202, %p203
    %p206 = scmp.ne.s32.totalorder %s191, %s205
    %p207 = scmp.eq.s32.totalorder %s22, 0
    %p208 = por %p206, %p207
    %s209 = ssub.s32 %s24, %s31
    %p210 = scmp.eq.s32.totalorder %s209, 0
    %s212 = sadd.s32 %s211, 1
    %s213 = scalar_select %p210, %s211, %s212
    %p216 = pneg %p210
    %p217 = scmp.eq.s32.totalorder %s16, 7
    %p218 = por %p216, %p217
    %p219 = scmp.ne.s32.totalorder %s211, %s214
    %p220 = scmp.eq.s32.totalorder %s16, 0
    %p221 = por %p219, %p220
    %p222 = scmp.ne.s32.totalorder %s211, %s214
    %p223 = scmp.eq.s32.totalorder %s21, 7
    %p224 = por %p222, %p223
    %p225 = scmp.ne.s32.totalorder %s214, %s215
    %p226 = scmp.eq.s32.totalorder %s21, 0
    %p227 = por %p225, %p226
    %p228 = scmp.ne.s32.totalorder %s214, %s215
    %p229 = scmp.eq.s32.totalorder %s22, 7
    %p230 = por %p228, %p229
    %p232 = scmp.ne.s32.totalorder %s215, %s231
    %p233 = scmp.eq.s32.totalorder %s22, 0
    %p234 = por %p232, %p233
    %s235 = ssub.s32 %s24, %s31
    %p236 = scmp.eq.s32.totalorder %s235, 0
    %s238 = sadd.s32 %s237, 1
    %s239 = scalar_select %p236, %s237, %s238
    %p242 = pneg %p236
    %p243 = scmp.eq.s32.totalorder %s16, 7
    %p244 = por %p242, %p243
    %p245 = scmp.ne.s32.totalorder %s237, %s240
    %p246 = scmp.eq.s32.totalorder %s16, 0
    %p247 = por %p245, %p246
    %p248 = scmp.ne.s32.totalorder %s237, %s240
    %p249 = scmp.eq.s32.totalorder %s21, 7
    %p250 = por %p248, %p249
    %p251 = scmp.ne.s32.totalorder %s240, %s241
    %p252 = scmp.eq.s32.totalorder %s21, 0
    %p253 = por %p251, %p252
    %p254 = scmp.ne.s32.totalorder %s240, %s241
    %p255 = scmp.eq.s32.totalorder %s22, 7
    %p256 = por %p254, %p255
    %p258 = scmp.ne.s32.totalorder %s241, %s257
    %p259 = scmp.eq.s32.totalorder %s22, 0
    %p260 = por %p258, %p259
    %p261 = scmp.le.s32.totalorder 1, %s16
    %p262 = scmp.lt.s32.totalorder %s16, 9
    %p263 = pnand %p261, %p262
    %p264 = pneg %p263
    // Predicated region
    $region9: #{net_forward.1} parent=5 // pred_check
      _
    $region10: #{net_forward.1} parent=5 // pred_check_branch
      %266 = sbr.rel (%p263) target = $region12
    $region11: #{net_forward.1} parent=5 // pred_region
      %s267 = ssub.s32 %s16, 1
      // Predicated region
      $region13: #{net_forward.1} parent=11 // pred_check
        %p268 = pneg %p75
      $region14: #{net_forward.1} parent=11 // pred_check_branch
        %270 = sbr.rel (%p268) target = $region16
      $region15: #{net_forward.1} parent=11 // pred_region
        _
      $region16: #{net_forward.1} parent=11 // pred_fallthru
        _
      // Predicated region
      $region17: #{net_forward.1} parent=11 // pred_check
        %p271 = pneg %p96
      $region18: #{net_forward.1} parent=11 // pred_check_branch
        %273 = sbr.rel (%p271) target = $region20
      $region19: #{net_forward.1} parent=11 // pred_region
        _
      $region20: #{net_forward.1} parent=11 // pred_fallthru
        _
      // Predicated region
      $region21: #{net_forward.1} parent=11 // pred_check
        %p274 = pneg %p117
      $region22: #{net_forward.1} parent=11 // pred_check_branch
        %276 = sbr.rel (%p274) target = $region24
      $region23: #{net_forward.1} parent=11 // pred_region
        _
      $region24: #{net_forward.1} parent=11 // pred_fallthru
        _
      // Predicated region
      $region25: #{net_forward.1} parent=11 // pred_check
        %p277 = pneg %p138
      $region26: #{net_forward.1} parent=11 // pred_check_branch
        %279 = sbr.rel (%p277) target = $region28
      $region27: #{net_forward.1} parent=11 // pred_region
        _
      $region28: #{net_forward.1} parent=11 // pred_fallthru
        _
      // Predicated region
      $region29: #{net_forward.1} parent=11 // pred_check
        %p280 = pneg %p159
      $region30: #{net_forward.1} parent=11 // pred_check_branch
        %282 = sbr.rel (%p280) target = $region32
      $region31: #{net_forward.1} parent=11 // pred_region
        _
      $region32: #{net_forward.1} parent=11 // pred_fallthru
        _
      // Predicated region
      $region33: #{net_forward.1} parent=11 // pred_check
        %p283 = pneg %p180
      $region34: #{net_forward.1} parent=11 // pred_check_branch
        %285 = sbr.rel (%p283) target = $region36
      $region35: #{net_forward.1} parent=11 // pred_region
        _
      $region36: #{net_forward.1} parent=11 // pred_fallthru
        _
      // Predicated region
      $region37: #{net_forward.1} parent=11 // pred_check
        %p286 = pneg %p201
      $region38: #{net_forward.1} parent=11 // pred_check_branch
        %288 = sbr.rel (%p286) target = $region40
      $region39: #{net_forward.1} parent=11 // pred_region
        _
      $region40: #{net_forward.1} parent=11 // pred_fallthru
        _
    $region12: #{net_forward.1} parent=5 // pred_fallthru
      _
    %p289 = scmp.lt.s32.totalorder %s16, 8
    // Predicated region
    $region41: #{net_forward.1} parent=5 // pred_check
      %p290 = pneg %p289
    $region42: #{net_forward.1} parent=5 // pred_check_branch
      %292 = sbr.rel (%p290) target = $region44
    $region43: #{net_forward.1} parent=5 // pred_region
      // Predicated region
      $region45: #{net_forward.1} parent=43 // pred_check
        %p293 = pneg %p48
      $region46: #{net_forward.1} parent=43 // pred_check_branch
        %295 = sbr.rel (%p293) target = $region48
      $region47: #{net_forward.1} parent=43 // pred_region
        %s296 = smul.u32 2, %s24
        %p297 = scmp.lt.s32.totalorder %s296, 7
        %s298 = scalar_select %p297, %s296, 7
        %s299 = smul.addr %s298, 4
        %s300 = scalar_lea.vmem %s0, %s299
        %s301 = smul.u32 2, %s24
      $region48: #{net_forward.1} parent=43 // pred_fallthru
        _
    $region44: #{net_forward.1} parent=5 // pred_fallthru
      _
    %p302 = scmp.le.s32.totalorder 1, %s16
    %p303 = scmp.lt.s32.totalorder %s16, 9
    %p304 = pnand %p302, %p303
    %p305 = pneg %p304
    // Predicated region
    $region49: #{net_forward.1} parent=5 // pred_check
      _
    $region50: #{net_forward.1} parent=5 // pred_check_branch
      %307 = sbr.rel (%p304) target = $region52
    $region51: #{net_forward.1} parent=5 // pred_region
      %s308 = ssub.s32 %s16, 1
      %s309 = smul.u32 2, %s26
      %p310 = scmp.lt.s32.totalorder %s309, 7
      %s311 = scalar_select %p310, %s309, 7
      %s312 = smul.addr %s311, 4
      %s313 = scalar_lea.vmem %s0, %s312
      %p314 = pneg %p54
      %p315 = pneg %p51
      %p316 = pneg %p75
      %p317 = pneg %p72
      %p318 = pneg %p96
      %p319 = pneg %p93
      %p320 = pneg %p117
      %p321 = pneg %p114
      %p322 = pneg %p138
      %p323 = pneg %p135
      %p324 = pneg %p159
      %p325 = pneg %p156
      %p326 = pneg %p180
      %p327 = pneg %p177
      %p328 = pneg %p201
      %p329 = pneg %p198
      %p330 = pneg %p227
      %p331 = pneg %p224
      %s332 = smul.u32 2, %s26
      %p333 = scmp.lt.s32.totalorder %s332, 7
      %s334 = scalar_select %p333, %s332, 7
      %s335 = smul.addr %s334, 8
      %s336 = scalar_lea.vmem %s8, %s335
      %p337 = pneg %p253
      %p338 = pneg %p250
      %s339 = smul.u32 2, %s26
      %p340 = scmp.lt.s32.totalorder %s339, 7
      %s341 = scalar_select %p340, %s339, 7
      %s342 = smul.addr %s341, 8
      %s343 = scalar_lea.vmem %s9, %s342
      %s344 = smul.u32 2, %s26
      %p345 = scmp.lt.s32.totalorder %s344, 7
      %s346 = scalar_select %p345, %s344, 7
      %s347 = smul.addr %s346, 4
      %s348 = scalar_lea.vmem %s0, %s347
      %s349 = smul.u32 2, %s26
      %s350 = smul.u32 2, %s26
      %p351 = scmp.lt.s32.totalorder %s350, 7
      %s352 = scalar_select %p351, %s350, 7
      %s353 = smul.addr %s352, 8
      %s354 = scalar_lea.vmem %s8, %s353
      %s355 = smul.u32 2, %s26
      %s356 = smul.u32 2, %s26
      %p357 = scmp.lt.s32.totalorder %s356, 7
      %s358 = scalar_select %p357, %s356, 7
      %s359 = smul.addr %s358, 8
      %s360 = scalar_lea.vmem %s9, %s359
      %s361 = smul.u32 2, %s26
      %s363 = smul.u32 %s26, 16
      %v364 = vld [vmem:[%s348] sm:$0xf]
      %v365 = vld [vmem:[%s348 + $0x4] sm:$0xf]
      %p366 = scmp.eq.s32.totalorder %s25, 0
      // Predicated region
      $region53: #{net_forward.1} parent=51 // pred_check
        %p367 = pneg %p366
      $region54: #{net_forward.1} parent=51 // pred_check_branch
        %369 = sbr.rel (%p367) target = $region56
      $region55: #{net_forward.1} parent=51 // pred_region
        %p370 = scmp.eq.s32.totalorder %s26, 0
        // Predicated region
        $region57: #{net_forward.1} parent=55 // pred_check
          %p371 = pneg %p370
        $region58: #{net_forward.1} parent=55 // pred_check_branch
          %373 = sbr.rel (%p371) target = $region60
        $region59: #{net_forward.1} parent=55 // pred_region
          %v374 = vld [vmem:[%s1] sm:$0xf]
          %v375 = vld [vmem:[%s1 + $0x4] sm:$0xf]
          %v376 = vld [vmem:[%s1 + $0x8] sm:$0xf]
          %v377 = vld [vmem:[%s1 + $0xc] sm:$0xf]
          %v378 = vld [vmem:[%s1 + $0x10] sm:$0xf]
          %v379 = vld [vmem:[%s1 + $0x14] sm:$0xf]
          %v380 = vld [vmem:[%s1 + $0x18] sm:$0xf]
          %v381 = vld [vmem:[%s1 + $0x1c] sm:$0xf]
          %v382 = vld [vmem:[%s2] sm:$0xf]
          %v383 = vld [vmem:[%s2 + $0x4] sm:$0xf]
          %v384 = vld [vmem:[%s2 + $0x8] sm:$0xf]
          %v385 = vld [vmem:[%s2 + $0xc] sm:$0xf]
          %v394 = vunpack.c.l.b16 %v374
          %v395 = vunpack.c.l.b16 %v375
          %v396 = vunpack.c.l.b16 %v376
          %v397 = vunpack.c.l.b16 %v377
          %v398 = vunpack.c.l.b16 %v378
          %v399 = vunpack.c.l.b16 %v379
          %v400 = vunpack.c.l.b16 %v380
          %v401 = vunpack.c.l.b16 %v381
          %v402 = vpack.c.b16 %v395, %v394
          %v403 = vpack.c.b16 %v397, %v396
          %v404 = vpack.c.b16 %v399, %v398
          %v405 = vpack.c.b16 %v401, %v400
          %v410 = vunpack.c.l.b16 %v382
          %v411 = vunpack.c.l.b16 %v383
          %v412 = vunpack.c.l.b16 %v384
          %v413 = vunpack.c.l.b16 %v385
          %v414 = vpack.c.b16 %v411, %v410
          %v415 = vpack.c.b16 %v413, %v412
          %vm418 = vcmask 261120
          %v420 = vsel %vm418, %v402, 0
          %v423 = vsel %vm418, %v403, 0
          %v426 = vsel %vm418, %v404, 0
          %v429 = vsel %vm418, %v405, 0
          %431 = vmatprep.subr.bf16.mxu0 0
          %432 = vmatpush1.bf16.msra.mxu0 %v414
          %433 = vmatprep.subr.bf16.mxu0 0
          %434 = vmatpush1.bf16.msra.mxu0 %v415
          %435 = vmatprep.subr.bf16.mxu0 0
          %436 = vmatpush1.bf16.msra.mxu0 0
          %437 = vmatprep.subr.bf16.mxu0 0
          %438 = vmatpush1.bf16.msra.mxu0 0
          %439 = vmatprep.subr.bf16.mxu0 0
          %440 = vmatpush1.bf16.msra.mxu0 0
          %441 = vmatprep.subr.bf16.mxu0 0
          %442 = vmatpush1.bf16.msra.mxu0 0
          %443 = vmatprep.subr.bf16.mxu0 0
          %444 = vmatpush1.bf16.msra.mxu0 0
          %445 = vmatprep.subr.bf16.mxu0 0
          %446 = vmatpush1.bf16.msra.mxu0 0
          %447 = vmatprep.subr.bf16.mxu0 0
          %448 = vmatpush1.bf16.msra.mxu0 0
          %449 = vmatprep.subr.bf16.mxu0 0
          %450 = vmatpush1.bf16.msra.mxu0 0
          %451 = vmatprep.subr.bf16.mxu0 0
          %452 = vmatpush1.bf16.msra.mxu0 0
          %453 = vmatprep.subr.bf16.mxu0 0
          %454 = vmatpush1.bf16.msra.mxu0 0
          %455 = vmatprep.subr.bf16.mxu0 0
          %456 = vmatpush1.bf16.msra.mxu0 0
          %457 = vmatprep.subr.bf16.mxu0 0
          %458 = vmatpush1.bf16.msra.mxu0 0
          %459 = vmatprep.subr.bf16.mxu0 0
          %460 = vmatpush1.bf16.msra.mxu0 0
          %461 = vmatprep.subr.bf16.mxu0 0
          %462 = vmatpush1.bf16.msra.mxu0 0
          %463 = vmatprep.mubr.bf16.mxu0 0
          %464 = vmatmul.mubr.bf16.gmra.mrb[0].mxu0 %v420
          %v465 = vpop.f32.mrb[0].mxu0
          %v466 = vadd.f32 0.0, %v465
          %v467 = vpop.f32.mrb[0].mxu0
          %v468 = vpop.f32.mrb[0].mxu0
          %v469 = vadd.f32 0.0, %v468
          %v470 = vpop.f32.mrb[0].mxu0
          %471 = vmatprep.mubr.bf16.mxu0 0
          %472 = vmatmul.mubr.bf16.gmra.mrb[0].mxu0 %v423
          %v473 = vpop.f32.mrb[0].mxu0
          %v474 = vadd.f32 0.0, %v473
          %v475 = vpop.f32.mrb[0].mxu0
          %v476 = vpop.f32.mrb[0].mxu0
          %v477 = vadd.f32 0.0, %v476
          %v478 = vpop.f32.mrb[0].mxu0
          %479 = vmatprep.mubr.bf16.mxu0 0
          %480 = vmatmul.mubr.bf16.gmra.mrb[0].mxu0 %v426
          %v481 = vpop.f32.mrb[0].mxu0
          %v482 = vadd.f32 0.0, %v481
          %v483 = vpop.f32.mrb[0].mxu0
          %v484 = vpop.f32.mrb[0].mxu0
          %v485 = vadd.f32 0.0, %v484
          %v486 = vpop.f32.mrb[0].mxu0
          %487 = vmatprep.mubr.bf16.mxu0 0
          %488 = vmatmul.mubr.bf16.gmra.mrb[0].mxu0 %v429
          %v489 = vpop.f32.mrb[0].mxu0
          %v490 = vadd.f32 0.0, %v489
          %v491 = vpop.f32.mrb[0].mxu0
          %v492 = vpop.f32.mrb[0].mxu0
          %v493 = vadd.f32 0.0, %v492
          %v494 = vpop.f32.mrb[0].mxu0
          %495 = vdwg.mxu0
          %v496 = vpack.c.bf16 %v469, %v466
          %v497 = vpack.c.bf16 %v477, %v474
          %v498 = vpack.c.bf16 %v485, %v482
          %v499 = vpack.c.bf16 %v493, %v490
          %500 = vst.msk [vmem:[#allocation2] sm:$0xff] %vm418, %v496
          %501 = vst.msk [vmem:[#allocation2 + $0x8] sm:$0xff] %vm418, %v497
          %502 = vst.msk [vmem:[#allocation2 + $0x10] sm:$0xff] %vm418, %v498
          %503 = vst.msk [vmem:[#allocation2 + $0x18] sm:$0xff] %vm418, %v499
        $region60: #{net_forward.1} parent=55 // pred_fallthru
          _
        %s504 = sshra.s32 %s363, 3
        %s505 = sand.u32 %s363, 7
        %s506 = smul.addr %s504, 4
        %s507 = scalar_lea.vmem %s1, %s506
        %v508 = vld [vmem:[%s507] sm:$0xf]
        %v509 = vld [vmem:[%s507 + $0x4] sm:$0xf]
        %v510 = vld [vmem:[%s3] sm:$0xf]
        %v511 = vld [vmem:[%s3 + $0x4] sm:$0xf]
        %v512 = vld [vmem:[%s3 + $0x8] sm:$0xf]
        %v513 = vld [vmem:[%s3 + $0xc] sm:$0xf]
        %v516 = vunpack.c.l.b16 %v508
        %v517 = vunpack.c.l.b16 %v509
        %v518 = vpack.c.b16 %v517, %v516
        %v523 = vunpack.c.l.b16 %v510
        %v524 = vunpack.c.l.b16 %v511
        %v525 = vunpack.c.l.b16 %v512
        %v526 = vunpack.c.l.b16 %v513
        %v527 = vpack.c.b16 %v524, %v523
        %v528 = vpack.c.b16 %v526, %v525
        %vm531 = vcmask 261120
        %v533 = vsel %vm531, %v518, 0
        %535 = vmatprep.subr.bf16.mxu0 0
        %536 = vmatpush1.bf16.msra.mxu0 %v527
        %537 = vmatprep.subr.bf16.mxu0 0
        %538 = vmatpush1.bf16.msra.mxu0 %v528
        %539 = vmatprep.subr.bf16.mxu0 0
        %540 = vmatpush1.bf16.msra.mxu0 0
        %541 = vmatprep.subr.bf16.mxu0 0
        %542 = vmatpush1.bf16.msra.mxu0 0
        %543 = vmatprep.subr.bf16.mxu0 0
        %544 = vmatpush1.bf16.msra.mxu0 0
        %545 = vmatprep.subr.bf16.mxu0 0
        %546 = vmatpush1.bf16.msra.mxu0 0
        %547 = vmatprep.subr.bf16.mxu0 0
        %548 = vmatpush1.bf16.msra.mxu0 0
        %549 = vmatprep.subr.bf16.mxu0 0
        %550 = vmatpush1.bf16.msra.mxu0 0
        %551 = vmatprep.subr.bf16.mxu0 0
        %552 = vmatpush1.bf16.msra.mxu0 0
        %553 = vmatprep.subr.bf16.mxu0 0
        %554 = vmatpush1.bf16.msra.mxu0 0
        %555 = vmatprep.subr.bf16.mxu0 0
        %556 = vmatpush1.bf16.msra.mxu0 0
        %557 = vmatprep.subr.bf16.mxu0 0
        %558 = vmatpush1.bf16.msra.mxu0 0
        %559 = vmatprep.subr.bf16.mxu0 0
        %560 = vmatpush1.bf16.msra.mxu0 0
        %561 = vmatprep.subr.bf16.mxu0 0
        %562 = vmatpush1.bf16.msra.mxu0 0
        %563 = vmatprep.subr.bf16.mxu0 0
        %564 = vmatpush1.bf16.msra.mxu0 0
        %565 = vmatprep.subr.bf16.mxu0 0
        %566 = vmatpush1.bf16.msra.mxu0 0
        %567 = vmatprep.mubr.bf16.mxu0 0
        %568 = vmatmul.mubr.bf16.gmra.mrb[0].mxu0 %v533
        %v569 = vpop.f32.mrb[0].mxu0
        %v570 = vadd.f32 0.0, %v569
        %v571 = vpop.f32.mrb[0].mxu0
        %v572 = vpop.f32.mrb[0].mxu0
        %v573 = vadd.f32 0.0, %v572
        %v574 = vpop.f32.mrb[0].mxu0
        %575 = vdwg.mxu0
        %v576 = vld [vmem:[#allocation2] sm:$0xff]
        %v577 = vld [vmem:[#allocation2 + $0x8] sm:$0xff]
        %v578 = vld [vmem:[#allocation2 + $0x10] sm:$0xff]
        %v579 = vld [vmem:[#allocation2 + $0x18] sm:$0xff]
        %v582 = vunpack.c.l.b16 %v364
        %v583 = vunpack.c.l.b16 %v365
        %v584 = vpack.c.b16 %v583, %v582
        %vm585 = vcmask 523264
        %v587 = vsel %vm585, %v584, 0
        %589 = vmatprep.subr.bf16.mxu0 0
        %590 = vmatpush1.bf16.msra.mxu0 %v576
        %591 = vmatprep.subr.bf16.mxu0 0
        %592 = vmatpush1.bf16.msra.mxu0 %v577
        %593 = vmatprep.subr.bf16.mxu0 0
        %594 = vmatpush1.bf16.msra.mxu0 %v578
        %595 = vmatprep.subr.bf16.mxu0 0
        %596 = vmatpush1.bf16.msra.mxu0 %v579
        %597 = vmatprep.subr.bf16.mxu0 0
        %598 = vmatpush1.bf16.msra.mxu0 0
        %599 = vmatprep.subr.bf16.mxu0 0
        %600 = vmatpush1.bf16.msra.mxu0 0
        %601 = vmatprep.subr.bf16.mxu0 0
        %602 = vmatpush1.bf16.msra.mxu0 0
        %603 = vmatprep.subr.bf16.mxu0 0
        %604 = vmatpush1.bf16.msra.mxu0 0
        %605 = vmatprep.subr.bf16.mxu0 0
        %606 = vmatpush1.bf16.msra.mxu0 0
        %607 = vmatprep.subr.bf16.mxu0 0
        %608 = vmatpush1.bf16.msra.mxu0 0
        %609 = vmatprep.subr.bf16.mxu0 0
        %610 = vmatpush1.bf16.msra.mxu0 0
        %611 = vmatprep.subr.bf16.mxu0 0
        %612 = vmatpush1.bf16.msra.mxu0 0
        %613 = vmatprep.subr.bf16.mxu0 0
        %614 = vmatpush1.bf16.msra.mxu0 0
        %615 = vmatprep.subr.bf16.mxu0 0
        %616 = vmatpush1.bf16.msra.mxu0 0
        %617 = vmatprep.subr.bf16.mxu0 0
        %618 = vmatpush1.bf16.msra.mxu0 0
        %619 = vmatprep.subr.bf16.mxu0 0
        %620 = vmatpush1.bf16.msra.mxu0 0
        %621 = vmatprep.mubr.bf16.mxu0 0
        %622 = vmatmul.mubr.bf16.gmra.mrb[0].mxu0 %v587
        %v623 = vpop.f32.mrb[0].mxu0
        %v624 = vadd.f32 %v570, %v623
        %v625 = vpop.f32.mrb[0].mxu0
        %v626 = vpop.f32.mrb[0].mxu0
        %v627 = vadd.f32 %v573, %v626
        %v628 = vpop.f32.mrb[0].mxu0
        %629 = vdwg.mxu0
        %v630 = vld [vmem:[%s4] sm:$0x1]
        %v632 = vlaneseq
        %v633 = vshrl.u32 %v632, 7
        %v634 = vsub.s32 0, %v633
        %v635 = vrot.slane %v630, %v634
        %v637 = vadd.f32 %v624, %v635
        %v638 = vadd.f32 %v627, %v635
        %v639 = vmax.f32 %v637, 0.0
        %v640 = vmax.f32 %v638, 0.0
        %643 = vrot.lane.b32.xlu0 %v639, 112
        %v644 = vpop.permute.xlu0 %643
        %645 = vrot.lane.b32.xlu0 %v640, 112
        %v646 = vpop.permute.xlu0 %645
        %v649 = vadd.f32 %v639, %v644
        %v650 = vadd.f32 %v640, %v646
        %v651 = vmul.f32 %v649, 0.5
        %v652 = vmul.f32 %v650, 0.5
        %s653 = scalar_lea.vmem [#allocation3], %s363
        %vm654 = vcmask 130048
        %655 = vst.msk [vmem:[%s653] sm:$0xff] %vm654, %v651
        %656 = vst.msk [vmem:[%s653 + $0x8] sm:$0xff] %vm654, %v652
        %657 = vst.msk [vmem:[%s360] sm:$0xff] %vm654, %v651
        %658 = vst.msk [vmem:[%s360 + $0x8] sm:$0xff] %vm654, %v652
        %vm659 = vcmask 31744
        %660 = vst.msk [vmem:[%s354] sm:$0xff] %vm659, 0.0
        %661 = vst.msk [vmem:[%s354 + $0x8] sm:$0xff] %vm659, 0.0
      $region56: #{net_forward.1} parent=51 // pred_fallthru
        _
      %p662 = scmp.eq.s32.totalorder %s25, 1
      // Predicated region
      $region61: #{net_forward.1} parent=51 // pred_check
        %p663 = pneg %p662
      $region62: #{net_forward.1} parent=51 // pred_check_branch
        %665 = sbr.rel (%p663) target = $region64
      $region63: #{net_forward.1} parent=51 // pred_region
        %p666 = scmp.eq.s32.totalorder %s26, 0
        // Predicated region
        $region65: #{net_forward.1} parent=63 // pred_check
          %p667 = pneg %p666
        $region66: #{net_forward.1} parent=63 // pred_check_branch
          %669 = sbr.rel (%p667) target = $region68
        $region67: #{net_forward.1} parent=63 // pred_region
          %v670 = vld [vmem:[#allocation3] sm:$0xff]
          %v671 = vld [vmem:[#allocation3 + $0x8] sm:$0xff]
          %v672 = vld [vmem:[#allocation3 + $0x10] sm:$0xff]
          %v673 = vld [vmem:[#allocation3 + $0x18] sm:$0xff]
          %v674 = vld [vmem:[#allocation3 + $0x20] sm:$0xff]
          %v675 = vld [vmem:[#allocation3 + $0x28] sm:$0xff]
          %v676 = vld [vmem:[#allocation3 + $0x30] sm:$0xff]
          %v677 = vld [vmem:[#allocation3 + $0x38] sm:$0xff]
          %v678 = vpack.c.bf16 %v671, %v670
          %v679 = vpack.c.bf16 %v673, %v672
          %v680 = vpack.c.bf16 %v675, %v674
          %v681 = vpack.c.bf16 %v677, %v676
          %v682 = vld [vmem:[%s5] sm:$0xf]
          %v683 = vld [vmem:[%s5 + $0x4] sm:$0xf]
          %v686 = vunpack.c.l.b16 %v682
          %v687 = vunpack.c.l.b16 %v683
          %v688 = vpack.c.b16 %v687, %v686
          %vm690 = vcmask 130048
          %v692 = vsel %vm690, %v678, 0
          %v695 = vsel %vm690, %v679, 0
          %v698 = vsel %vm690, %v680, 0
          %v701 = vsel %vm690, %v681, 0
          %703 = vmatprep.subr.bf16.mxu0 0
          %704 = vmatpush1.bf16.msra.mxu0 %v688
          %705 = vmatprep.subr.bf16.mxu0 0
          %706 = vmatpush1.bf16.msra.mxu0 0
          %707 = vmatprep.subr.bf16.mxu0 0
          %708 = vmatpush1.bf16.msra.mxu0 0
          %709 = vmatprep.subr.bf16.mxu0 0
          %710 = vmatpush1.bf16.msra.mxu0 0
          %711 = vmatprep.subr.bf16.mxu0 0
          %712 = vmatpush1.bf16.msra.mxu0 0
          %713 = vmatprep.subr.bf16.mxu0 0
          %714 = vmatpush1.bf16.msra.mxu0 0
          %715 = vmatprep.subr.bf16.mxu0 0
          %716 = vmatpush1.bf16.msra.mxu0 0
          %717 = vmatprep.subr.bf16.mxu0 0
          %718 = vmatpush1.bf16.msra.mxu0 0
          %719 = vmatprep.subr.bf16.mxu0 0
          %720 = vmatpush1.bf16.msra.mxu0 0
          %721 = vmatprep.subr.bf16.mxu0 0
          %722 = vmatpush1.bf16.msra.mxu0 0
          %723 = vmatprep.subr.bf16.mxu0 0
          %724 = vmatpush1.bf16.msra.mxu0 0
          %725 = vmatprep.subr.bf16.mxu0 0
          %726 = vmatpush1.bf16.msra.mxu0 0
          %727 = vmatprep.subr.bf16.mxu0 0
          %728 = vmatpush1.bf16.msra.mxu0 0
          %729 = vmatprep.subr.bf16.mxu0 0
          %730 = vmatpush1.bf16.msra.mxu0 0
          %731 = vmatprep.subr.bf16.mxu0 0
          %732 = vmatpush1.bf16.msra.mxu0 0
          %733 = vmatprep.subr.bf16.mxu0 0
          %734 = vmatpush1.bf16.msra.mxu0 0
          %735 = vmatprep.mubr.bf16.mxu0 0
          %736 = vmatmul.mubr.bf16.gmra.mrb[0].mxu0 %v692
          %v737 = vpop.f32.mrb[0].mxu0
          %v738 = vadd.f32 0.0, %v737
          %v739 = vpop.f32.mrb[0].mxu0
          %v740 = vpop.f32.mrb[0].mxu0
          %v741 = vadd.f32 0.0, %v740
          %v742 = vpop.f32.mrb[0].mxu0
          %743 = vmatprep.mubr.bf16.mxu0 0
          %744 = vmatmul.mubr.bf16.gmra.mrb[0].mxu0 %v695
          %v745 = vpop.f32.mrb[0].mxu0
          %v746 = vadd.f32 0.0, %v745
          %v747 = vpop.f32.mrb[0].mxu0
          %v748 = vpop.f32.mrb[0].mxu0
          %v749 = vadd.f32 0.0, %v748
          %v750 = vpop.f32.mrb[0].mxu0
          %751 = vmatprep.mubr.bf16.mxu0 0
          %752 = vmatmul.mubr.bf16.gmra.mrb[0].mxu0 %v698
          %v753 = vpop.f32.mrb[0].mxu0
          %v754 = vadd.f32 0.0, %v753
          %v755 = vpop.f32.mrb[0].mxu0
          %v756 = vpop.f32.mrb[0].mxu0
          %v757 = vadd.f32 0.0, %v756
          %v758 = vpop.f32.mrb[0].mxu0
          %759 = vmatprep.mubr.bf16.mxu0 0
          %760 = vmatmul.mubr.bf16.gmra.mrb[0].mxu0 %v701
          %v761 = vpop.f32.mrb[0].mxu0
          %v762 = vadd.f32 0.0, %v761
          %v763 = vpop.f32.mrb[0].mxu0
          %v764 = vpop.f32.mrb[0].mxu0
          %v765 = vadd.f32 0.0, %v764
          %v766 = vpop.f32.mrb[0].mxu0
          %767 = vdwg.mxu0
          %v768 = vpack.c.bf16 %v741, %v738
          %v769 = vpack.c.bf16 %v749, %v746
          %v770 = vpack.c.bf16 %v757, %v754
          %v771 = vpack.c.bf16 %v765, %v762
          %vm772 = vcmask 31744
          %773 = vst.msk [vmem:[#allocation4] sm:$0xff] %vm772, %v768
          %774 = vst.msk [vmem:[#allocation4 + $0x8] sm:$0xff] %vm772, %v769
          %775 = vst.msk [vmem:[#allocation4 + $0x10] sm:$0xff] %vm772, %v770
          %776 = vst.msk [vmem:[#allocation4 + $0x18] sm:$0xff] %vm772, %v771
        $region68: #{net_forward.1} parent=63 // pred_fallthru
          _
        %s777 = scalar_lea.vmem [#allocation3], %s363
        %v778 = vld [vmem:[%s777] sm:$0xff]
        %v779 = vld [vmem:[%s777 + $0x8] sm:$0xff]
        %v780 = vpack.c.bf16 %v779, %v778
        %v781 = vld [vmem:[%s6] sm:$0xf]
        %v782 = vld [vmem:[%s6 + $0x4] sm:$0xf]
        %v785 = vunpack.c.l.b16 %v781
        %v786 = vunpack.c.l.b16 %v782
        %v787 = vpack.c.b16 %v786, %v785
        %vm789 = vcmask 130048
        %v791 = vsel %vm789, %v780, 0
        %793 = vmatprep.subr.bf16.mxu0 0
        %794 = vmatpush1.bf16.msra.mxu0 %v787
        %795 = vmatprep.subr.bf16.mxu0 0
        %796 = vmatpush1.bf16.msra.mxu0 0
        %797 = vmatprep.subr.bf16.mxu0 0
        %798 = vmatpush1.bf16.msra.mxu0 0
        %799 = vmatprep.subr.bf16.mxu0 0
        %800 = vmatpush1.bf16.msra.mxu0 0
        %801 = vmatprep.subr.bf16.mxu0 0
        %802 = vmatpush1.bf16.msra.mxu0 0
        %803 = vmatprep.subr.bf16.mxu0 0
        %804 = vmatpush1.bf16.msra.mxu0 0
        %805 = vmatprep.subr.bf16.mxu0 0
        %806 = vmatpush1.bf16.msra.mxu0 0
        %807 = vmatprep.subr.bf16.mxu0 0
        %808 = vmatpush1.bf16.msra.mxu0 0
        %809 = vmatprep.subr.bf16.mxu0 0
        %810 = vmatpush1.bf16.msra.mxu0 0
        %811 = vmatprep.subr.bf16.mxu0 0
        %812 = vmatpush1.bf16.msra.mxu0 0
        %813 = vmatprep.subr.bf16.mxu0 0
        %814 = vmatpush1.bf16.msra.mxu0 0
        %815 = vmatprep.subr.bf16.mxu0 0
        %816 = vmatpush1.bf16.msra.mxu0 0
        %817 = vmatprep.subr.bf16.mxu0 0
        %818 = vmatpush1.bf16.msra.mxu0 0
        %819 = vmatprep.subr.bf16.mxu0 0
        %820 = vmatpush1.bf16.msra.mxu0 0
        %821 = vmatprep.subr.bf16.mxu0 0
        %822 = vmatpush1.bf16.msra.mxu0 0
        %823 = vmatprep.subr.bf16.mxu0 0
        %824 = vmatpush1.bf16.msra.mxu0 0
        %825 = vmatprep.mubr.bf16.mxu0 0
        %826 = vmatmul.mubr.bf16.gmra.mrb[0].mxu0 %v791
        %v827 = vpop.f32.mrb[0].mxu0
        %v828 = vadd.f32 0.0, %v827
        %v829 = vpop.f32.mrb[0].mxu0
        %v830 = vpop.f32.mrb[0].mxu0
        %v831 = vadd.f32 0.0, %v830
        %v832 = vpop.f32.mrb[0].mxu0
        %833 = vdwg.mxu0
        %v834 = vld [vmem:[#allocation4] sm:$0xff]
        %v835 = vld [vmem:[#allocation4 + $0x8] sm:$0xff]
        %v836 = vld [vmem:[#allocation4 + $0x10] sm:$0xff]
        %v837 = vld [vmem:[#allocation4 + $0x18] sm:$0xff]
        %v840 = vunpack.c.l.b16 %v364
        %v841 = vunpack.c.l.b16 %v365
        %v842 = vpack.c.b16 %v841, %v840
        %vm843 = vcmask 523264
        %v845 = vsel %vm843, %v842, 0
        %847 = vmatprep.subr.bf16.mxu0 0
        %848 = vmatpush1.bf16.msra.mxu0 %v834
        %849 = vmatprep.subr.bf16.mxu0 0
        %850 = vmatpush1.bf16.msra.mxu0 %v835
        %851 = vmatprep.subr.bf16.mxu0 0
        %852 = vmatpush1.bf16.msra.mxu0 %v836
        %853 = vmatprep.subr.bf16.mxu0 0
        %854 = vmatpush1.bf16.msra.mxu0 %v837
        %855 = vmatprep.subr.bf16.mxu0 0
        %856 = vmatpush1.bf16.msra.mxu0 0
        %857 = vmatprep.subr.bf16.mxu0 0
        %858 = vmatpush1.bf16.msra.mxu0 0
        %859 = vmatprep.subr.bf16.mxu0 0
        %860 = vmatpush1.bf16.msra.mxu0 0
        %861 = vmatprep.subr.bf16.mxu0 0
        %862 = vmatpush1.bf16.msra.mxu0 0
        %863 = vmatprep.subr.bf16.mxu0 0
        %864 = vmatpush1.bf16.msra.mxu0 0
        %865 = vmatprep.subr.bf16.mxu0 0
        %866 = vmatpush1.bf16.msra.mxu0 0
        %867 = vmatprep.subr.bf16.mxu0 0
        %868 = vmatpush1.bf16.msra.mxu0 0
        %869 = vmatprep.subr.bf16.mxu0 0
        %870 = vmatpush1.bf16.msra.mxu0 0
        %871 = vmatprep.subr.bf16.mxu0 0
        %872 = vmatpush1.bf16.msra.mxu0 0
        %873 = vmatprep.subr.bf16.mxu0 0
        %874 = vmatpush1.bf16.msra.mxu0 0
        %875 = vmatprep.subr.bf16.mxu0 0
        %876 = vmatpush1.bf16.msra.mxu0 0
        %877 = vmatprep.subr.bf16.mxu0 0
        %878 = vmatpush1.bf16.msra.mxu0 0
        %879 = vmatprep.mubr.bf16.mxu0 0
        %880 = vmatmul.mubr.bf16.gmra.mrb[0].mxu0 %v845
        %v881 = vpop.f32.mrb[0].mxu0
        %v882 = vadd.f32 %v828, %v881
        %v883 = vpop.f32.mrb[0].mxu0
        %v884 = vpop.f32.mrb[0].mxu0
        %v885 = vadd.f32 %v831, %v884
        %v886 = vpop.f32.mrb[0].mxu0
        %887 = vdwg.mxu0
        %v888 = vld [vmem:[%s7] sm:$0x1]
        %v890 = vlaneseq
        %v891 = vshrl.u32 %v890, 7
        %v892 = vsub.s32 0, %v891
        %v893 = vrot.slane %v888, %v892
        %v895 = vadd.f32 %v882, %v893
        %v896 = vadd.f32 %v885, %v893
        %vm897 = vcmask 31744
        %v898 = vsel %vm897, %v895, -inf
        %899 = vmax.xlane.f32.xlu0 %v898
        %v900 = vpop.xlane.xlu0 %899
        %v901 = vsel %vm897, %v896, -inf
        %902 = vmax.xlane.f32.xlu0 %v901
        %v903 = vpop.xlane.xlu0 %902
        %v904 = vsub.f32 %v895, %v900
        %v905 = vsub.f32 %v896, %v903
        %v906 = vmul.f32 %v904, 1.442695
        %v907 = vpow.pop %v906
        %v908 = vmul.f32 %v905, 1.442695
        %v909 = vpow.pop %v908
        %v910 = vsel %vm897, %v907, 0.0
        %911 = vadd.xlane.f32.xlu0 %v910
        %v912 = vpop.xlane.xlu0 %911
        %v913 = vsel %vm897, %v909, 0.0
        %914 = vadd.xlane.f32.xlu0 %v913
        %v915 = vpop.xlane.xlu0 %914
        %v916 = vlog2.pop %v912
        %v917 = vmul.f32 %v916, 0.6931472
        %v918 = vlog2.pop %v915
        %v919 = vmul.f32 %v918, 0.6931472
        %v920 = vsub.f32 %v904, %v917
        %v921 = vsub.f32 %v905, %v919
        %922 = vst.msk [vmem:[%s354] sm:$0xff] %vm897, %v920
        %923 = vst.msk [vmem:[%s354 + $0x8] sm:$0xff] %vm897, %v921
        %924 = vst.msk [vmem:[%s360] sm:$0xff] %vm789, %v778
        %925 = vst.msk [vmem:[%s360 + $0x8] sm:$0xff] %vm789, %v779
      $region64: #{net_forward.1} parent=51 // pred_fallthru
        _
      %s926 = smul.u32 2, %s26
      %p927 = scmp.lt.s32.totalorder %s926, 7
      %s928 = scalar_select %p927, %s926, 7
      %s929 = smul.addr %s928, 8
      %s930 = scalar_lea.vmem %s8, %s929
      %s931 = smul.u32 2, %s26
      %p932 = scmp.lt.s32.totalorder %s931, 7
      %s933 = scalar_select %p932, %s931, 7
      %s934 = smul.addr %s933, 8
      %s935 = scalar_lea.vmem %s9, %s934
      // Predicated region
      $region69: #{net_forward.1} parent=51 // pred_check
        %p936 = pneg %p224
      $region70: #{net_forward.1} parent=51 // pred_check_branch
        %938 = sbr.rel (%p936) target = $region72
      $region71: #{net_forward.1} parent=51 // pred_region
        %s939 = smul.u32 2, %s26
      $region72: #{net_forward.1} parent=51 // pred_fallthru
        _
      // Predicated region
      $region73: #{net_forward.1} parent=51 // pred_check
        %p940 = pneg %p250
      $region74: #{net_forward.1} parent=51 // pred_check_branch
        %942 = sbr.rel (%p940) target = $region76
      $region75: #{net_forward.1} parent=51 // pred_region
        %s943 = smul.u32 2, %s26
      $region76: #{net_forward.1} parent=51 // pred_fallthru
        _
    $region52: #{net_forward.1} parent=5 // pred_fallthru
      _
    %p944 = scmp.le.s32.totalorder 2, %s16
    // Predicated region
    $region77: #{net_forward.1} parent=5 // pred_check
      %p945 = pneg %p944
    $region78: #{net_forward.1} parent=5 // pred_check_branch
      %947 = sbr.rel (%p945) target = $region80
    $region79: #{net_forward.1} parent=5 // pred_region
      %s948 = ssub.s32 %s16, 2
      // Predicated region
      $region81: #{net_forward.1} parent=79 // pred_check
        %p949 = pneg %p230
      $region82: #{net_forward.1} parent=79 // pred_check_branch
        %951 = sbr.rel (%p949) target = $region84
      $region83: #{net_forward.1} parent=79 // pred_region
        %s952 = smul.u32 2, %s28
        %p953 = scmp.lt.s32.totalorder %s952, 7
        %s954 = scalar_select %p953, %s952, 7
        %s955 = smul.addr %s954, 8
        %s956 = scalar_lea.vmem %s8, %s955
      $region84: #{net_forward.1} parent=79 // pred_fallthru
        _
      // Predicated region
      $region85: #{net_forward.1} parent=79 // pred_check
        %p957 = pneg %p256
      $region86: #{net_forward.1} parent=79 // pred_check_branch
        %959 = sbr.rel (%p957) target = $region88
      $region87: #{net_forward.1} parent=79 // pred_region
        %s960 = smul.u32 2, %s28
        %p961 = scmp.lt.s32.totalorder %s960, 7
        %s962 = scalar_select %p961, %s960, 7
        %s963 = smul.addr %s962, 8
        %s964 = scalar_lea.vmem %s9, %s963
      $region88: #{net_forward.1} parent=79 // pred_fallthru
        _
    $region80: #{net_forward.1} parent=5 // pred_fallthru
      _
  $region6: #{net_forward.1} parent=0 // loop_footer
    %s20 = sadd.s32 1, %s16
  $region7: #{net_forward.1} parent=0 // loop_footer_branch
    %15 = sbr.rel target = $region3
  $region8: #{net_forward.1} parent=0 // loop_exit
    _

</llo_original>
